<compile_context>
chip_gen: v5e
topology: v5e:2x2
jax: 0.10.0
libtpu: 0.0.40
codegen_flags: <defaults>
</compile_context>

<pallas_src>
import numpy as np
import jax
import jax.numpy as jnp
from jax.experimental import pallas as pl
from jax.experimental.pallas import tpu as pltpu


def _round_up(x: int, n: int) -> int:
    return ((x + n - 1) // n) * n


def _cdiv(a: int, b: int) -> int:
    return (a + b - 1) // b


# ---------------------------------------------------------------------------
# kernels
# ---------------------------------------------------------------------------
def _zip_reduce_kernel_f32(x_ref, w_ref, b_ref, o_ref):
    """Grid = (N tiles, D_out tiles, M heads).  The f32 output block is
    resident across the trailing M axis and accumulated in place; the
    pre-summed bias seeds it at m == 0."""
    m = pl.program_id(2)

    @pl.when(m == 0)
    def _():
        o_ref[...] = jnp.broadcast_to(b_ref[...], o_ref.shape)

    x = x_ref[...].astype(jnp.bfloat16)          # cast on-chip, not in XLA
    o_ref[...] += jnp.dot(x, w_ref[...], preferred_element_type=jnp.float32)


def _zip_reduce_kernel_scratch(x_ref, w_ref, b_ref, o_ref, acc_ref):
    """Same reduction but with an f32 VMEM scratch accumulator; the result is
    cast to the (narrow) output dtype once at the last head."""
    m = pl.program_id(2)

    @pl.when(m == 0)
    def _():
        acc_ref[...] = jnp.broadcast_to(b_ref[...], acc_ref.shape)

    x = x_ref[...].astype(jnp.bfloat16)
    acc_ref[...] += jnp.dot(x, w_ref[...], preferred_element_type=jnp.float32)

    @pl.when(m == pl.num_programs(2) - 1)
    def _():
        o_ref[...] = acc_ref[...].astype(o_ref.dtype)


# ---------------------------------------------------------------------------
# wrapper
# ---------------------------------------------------------------------------
def zip_reduce_variables(xs, Ws, bs, mix_weights, *, fold_heads=None,
                         tm_max=512, tn_max=512, out_dtype=jnp.float32):
    """
    xs:  [M, N, D_in]      stacked head inputs (N = flattened batch*time rows)
    Ws:  [M, D_in, D_out]  head weights (PyTorch weight.T)
    bs:  [M, 1, D_out]     head biases
    mix_weights: [M]       ones / 1/M / softmax(param)   (per ZipMode)
    returns y: [N, D_out] in out_dtype (f32 by default; bf16 supported).
    """
    M, N, D_in = xs.shape
    D_out = Ws.shape[-1]
    out_dtype = np.dtype(out_dtype)

    # ---- fold mix weights into weights / bias (tiny tensors; exact math) ---
    w = mix_weights.astype(jnp.float32)
    Ws_s = Ws.astype(jnp.float32) * w[:, None, None]
    b_total = jnp.sum(bs.reshape(M, D_out) * w[:, None], axis=0, keepdims=True)

    # ---- optionally collapse M heads into one K = M*D_in matmul ------------
    # The fold needs a transposed HBM copy of x, so only take it when x is
    # tiny; for large x the M-1 extra grid steps are far cheaper.
    xs_bytes = M * N * D_in * xs.dtype.itemsize
    if fold_heads is None:
        fold_heads = (M > 1) and (xs_bytes <= (2 << 20)) and (M * D_in <= 4096)
    if fold_heads and M > 1:
        x_c = jnp.transpose(xs, (1, 0, 2)).reshape(N, M * D_in)[None]
        w_c = Ws_s.reshape(M * D_in, D_out)[None]
        M_eff = 1
    else:
        x_c, w_c, M_eff = xs, Ws_s, M
    K = x_c.shape[-1]

    # Weights are tiny -> wrapper-side bf16 cast is negligible HBM traffic.
    w_c = w_c.astype(jnp.bfloat16)

    # ---- column tile: cover all of D_out in one j tile whenever possible ---
    if D_out <= max(int(tn_max), 128):
        # single j tile, block last-dim == full array dim (always legal):
        # no lane padding, no wrapper slice, x is streamed exactly once.
        tn, D_out_p = D_out, D_out
    else:
        tn = max(128, (int(tn_max) // 128) * 128)
        D_out_p = _round_up(D_out, 128)
        w_c = jnp.pad(w_c, ((0, 0), (0, 0), (0, D_out_p - D_out)))
        b_total = jnp.pad(b_total, ((0, 0), (0, D_out_p - D_out)))

    # ---- row tile: multiple of 16 (bf16 sublane packing), balanced tiles,
    #      and NO padding of x (the last row tile is an edge block). --------
    if N <= tm_max:
        tm = _round_up(N, 16)
    else:
        tm = _round_up(_cdiv(N, _cdiv(N, int(tm_max))), 16)

    # ---- explicit VMEM budget (double-buffered blocks); fits v7x 64 MiB ----
    def _vmem_need(tm_, tn_):
        need = (2 * tm_ * K * x_c.dtype.itemsize      # x blocks
                + 2 * K * tn_ * 2                     # W blocks (bf16)
                + 2 * tn_ * 4                         # bias blocks
                + 2 * tm_ * tn_ * 4)                  # output blocks
        if out_dtype != np.dtype(jnp.float32):
            need += tm_ * tn_ * 4                     # f32 scratch accumulator
        return need

    budget = 48 * 1024 * 1024
    while _vmem_need(tm, tn) > budget and tm > 16:
        tm = max(16, _round_up(tm // 2, 16))
    while _vmem_need(tm, tn) > budget and tn > 128 and tn % 128 == 0:
        tn = max(128, _round_up(tn // 2, 128))
    vmem_limit = int(min(56 * 1024 * 1024,
                         max(_vmem_need(tm, tn) + (4 << 20), 16 * 1024 * 1024)))

    grid = (_cdiv(N, tm), _cdiv(D_out_p, tn), M_eff)

    if out_dtype == np.dtype(jnp.float32):
        kernel = _zip_reduce_kernel_f32
        scratch_shapes = []
    else:
        kernel = _zip_reduce_kernel_scratch
        scratch_shapes = [pltpu.VMEM((tm, tn), jnp.float32)]

    grid_spec = pltpu.PrefetchScalarGridSpec(
        num_scalar_prefetch=0,
        grid=grid,
        in_specs=[
            pl.BlockSpec((pl.Squeezed(), tm, K), lambda i, j, m: (m, i, 0)),
            pl.BlockSpec((pl.Squeezed(), K, tn), lambda i, j, m: (m, 0, j)),
            pl.BlockSpec((1, tn), lambda i, j, m: (0, j)),
        ],
        out_specs=pl.BlockSpec((tm, tn), lambda i, j, m: (i, j)),
        scratch_shapes=scratch_shapes,
    )

    y = pl.pallas_call(
        kernel,
        out_shape=jax.ShapeDtypeStruct((N, D_out_p), out_dtype),
        grid_spec=grid_spec,
        compiler_params=pltpu.CompilerParams(
            # i / j tiles are independent (megacore-shardable on v7x);
            # the trailing M axis is the reduction.
            dimension_semantics=("parallel", "parallel", "arbitrary"),
            vmem_limit_bytes=vmem_limit,
        ),
    )(x_c, w_c, b_total)

    if D_out_p != D_out:
        y = y[:, :D_out]
    return y


def make_mix_weights(mode: str, M: int, key) -> jnp.ndarray:
    """Replicates ZipReduceVariables.__init__ + the softmax in forward()."""
    if mode == "sum":
        return jnp.ones((M,), jnp.float32)
    elif mode == "mean":
        return jnp.ones((M,), jnp.float32) / M
    elif mode == "static_mix":
        # parameter = -rand(M); forward applies softmax since it requires grad
        p = -jax.random.uniform(key, (M,), jnp.float32)
        return jax.nn.softmax(p, axis=0)
    else:
        raise ValueError(mode)


if __name__ == "__main__":
    key = jax.random.PRNGKey(0)
    k_x, k_w, k_b, k_mix = jax.random.split(key, 4)

    # Small shapes consistent with the module: M=3 heads, batch=2, seq=8
    # -> N=16 rows, hidden 32 -> 32.
    M, B, T, D_in, D_out = 3, 2, 8, 32, 32
    N = B * T

    xs = jax.random.normal(k_x, (M, N, D_in), jnp.float32)
    Ws = 0.05 * jax.random.normal(k_w, (M, D_in, D_out), jnp.float32)
    bs = 0.1 * jax.random.normal(k_b, (M, 1, D_out), jnp.float32)
    mix_w = make_mix_weights("static_mix", M, k_mix)

    # --- references ---------------------------------------------------------
    def ref_f32(xs_, Ws_, bs_, mw_):
        y = jnp.zeros((xs_.shape[1], Ws_.shape[-1]), jnp.float32)
        for i in range(xs_.shape[0]):
            y = y + (xs_[i] @ Ws_[i] + bs_[i]) * mw_[i]
        return y

    def ref_bf16(xs_, Ws_, bs_, mw_):
        # kernel math with bf16-rounded operands, f32 accumulation
        M_, _, _ = xs_.shape
        Do_ = Ws_.shape[-1]
        xs_b = xs_.astype(jnp.bfloat16).astype(jnp.float32)
        Ws_b = (Ws_ * mw_[:, None, None]).astype(jnp.bfloat16).astype(jnp.float32)
        b_tot = jnp.sum(bs_.reshape(M_, Do_) * mw_[:, None], axis=0)
        y = jnp.zeros((xs_.shape[1], Do_), jnp.float32)
        for i in range(M_):
            y = y + jnp.dot(xs_b[i], Ws_b[i],
                            precision=jax.lax.Precision.HIGHEST)
        return y + b_tot

    y_f32 = ref_f32(xs, Ws, bs, mix_w)
    y_b16 = ref_bf16(xs, Ws, bs, mix_w)

    # --- run kernel: fused-K path and M-grid path ----------------------------
    for fold in (True, False):
        y = jax.block_until_ready(
            zip_reduce_variables(xs, Ws, bs, mix_w, fold_heads=fold))
        assert y.shape == (N, D_out) and y.dtype == jnp.float32
        assert jnp.allclose(y, y_b16, atol=1e-4, rtol=1e-4), \
            f"mismatch vs bf16-rounded reference (fold_heads={fold})"
        assert jnp.allclose(y, y_f32, atol=3e-2, rtol=3e-2), \
            f"mismatch vs f32 reference (fold_heads={fold})"

    # --- bf16-output path (f32 VMEM scratch accumulator) ---------------------
    y16 = jax.block_until_ready(
        zip_reduce_variables(xs, Ws, bs, mix_w, fold_heads=False,
                             out_dtype=jnp.bfloat16))
    assert y16.dtype == jnp.bfloat16 and y16.shape == (N, D_out)
    assert jnp.allclose(y16.astype(jnp.float32), y_b16, atol=2e-2, rtol=2e-2), \
        "mismatch on bf16-output path"

    # --- edge-block path: N not tile-aligned, D_out < 128, 'mean' mode -------
    M2, B2, T2, Din2, Dout2 = 2, 5, 9, 24, 48       # N = 45 (edge row tile)
    N2 = B2 * T2
    xs2 = jax.random.normal(jax.random.PRNGKey(1), (M2, N2, Din2), jnp.float32)
    Ws2 = 0.05 * jax.random.normal(jax.random.PRNGKey(2),
                                   (M2, Din2, Dout2), jnp.float32)
    bs2 = 0.1 * jax.random.normal(jax.random.PRNGKey(3),
                                  (M2, 1, Dout2), jnp.float32)
    mix2 = make_mix_weights("mean", M2, k_mix)
    y2 = jax.block_until_ready(
        zip_reduce_variables(xs2, Ws2, bs2, mix2, fold_heads=False))
    assert y2.shape == (N2, Dout2)
    assert jnp.allclose(y2, ref_bf16(xs2, Ws2, bs2, mix2), atol=1e-4, rtol=1e-4)
    assert jnp.allclose(y2, ref_f32(xs2, Ws2, bs2, mix2), atol=3e-2, rtol=3e-2)

    print("KERNEL_OK")
</pallas_src>

<mosaic_0001>
module attributes {stable_mosaic.version = 11 : i64} {
  func.func @_zip_reduce_kernel_f32(%arg0: i32, %arg1: i32, %arg2: i32, %arg3: memref<1x16x96xf32, #tpu.memory_space<vmem>>, %arg4: memref<1x96x32xbf16, #tpu.memory_space<vmem>>, %arg5: memref<1x32xf32, #tpu.memory_space<vmem>>, %arg6: memref<16x32xf32, #tpu.memory_space<vmem>>) attributes {dimension_semantics = [#tpu.dimension_semantics<parallel>, #tpu.dimension_semantics<parallel>, #tpu.dimension_semantics<arbitrary>], iteration_bounds = array<i64: 1, 1, 1>, scalar_prefetch = 0 : i64, scratch_operands = 0 : i64, tpu.core_type = #tpu.core_type<tc>, window_params = [{transform_indices = @transform_0, window_bounds = array<i64: 1, 16, 96>}, {transform_indices = @transform_1, window_bounds = array<i64: 1, 96, 32>}, {transform_indices = @transform_2, window_bounds = array<i64: 1, 32>}, {transform_indices = @transform_3, window_bounds = array<i64: 16, 32>}]} {
    %c0_i32 = arith.constant 0 : i32
    %0 = arith.cmpi eq, %arg2, %c0_i32 : i32
    %1 = arith.extui %0 : i1 to i32
    %c0_i32_0 = arith.constant 0 : i32
    %2 = arith.cmpi ne, %1, %c0_i32_0 : i32
    scf.if %2 {
      %c0_10 = arith.constant 0 : index
      %c0_11 = arith.constant 0 : index
      %12 = vector.load %arg5[%c0_10, %c0_11] : memref<1x32xf32, #tpu.memory_space<vmem>>, vector<1x32xf32>
      %13 = vector.shape_cast %12 : vector<1x32xf32> to vector<1x32xf32>
      %14 = vector.broadcast %13 : vector<1x32xf32> to vector<16x32xf32>
      %c0_12 = arith.constant 0 : index
      %c0_13 = arith.constant 0 : index
      %15 = vector.load %arg6[%c0_12, %c0_13] : memref<16x32xf32, #tpu.memory_space<vmem>>, vector<16x32xf32>
      tpu.vector_store %arg6[%c0_12, %c0_13], %14 {strides = array<i32>} : memref<16x32xf32, #tpu.memory_space<vmem>>, vector<16x32xf32>,
    } else {
    }
    %c0 = arith.constant 0 : index
    %c0_1 = arith.constant 0 : index
    %c0_2 = arith.constant 0 : index
    %3 = vector.load %arg3[%c0, %c0_1, %c0_2] : memref<1x16x96xf32, #tpu.memory_space<vmem>>, vector<1x16x96xf32>
    %4 = vector.shape_cast %3 : vector<1x16x96xf32> to vector<16x96xf32>
    %5 = arith.truncf %4 : vector<16x96xf32> to vector<16x96xbf16>
    %c0_3 = arith.constant 0 : index
    %c0_4 = arith.constant 0 : index
    %6 = vector.load %arg6[%c0_3, %c0_4] : memref<16x32xf32, #tpu.memory_space<vmem>>, vector<16x32xf32>
    %c0_5 = arith.constant 0 : index
    %c0_6 = arith.constant 0 : index
    %c0_7 = arith.constant 0 : index
    %7 = vector.load %arg4[%c0_5, %c0_6, %c0_7] : memref<1x96x32xbf16, #tpu.memory_space<vmem>>, vector<1x96x32xbf16>
    %8 = vector.shape_cast %7 : vector<1x96x32xbf16> to vector<96x32xbf16>
    %cst = arith.constant dense<0.000000e+00> : vector<16x32xf32>
    %9 = tpu.matmul %5, %8, %cst {dimension_numbers = #tpu.dot_dimension_numbers<[1], [0], [0], [1], [0, 0, 1, 1], [], []>} : vector<16x96xbf16>, vector<96x32xbf16>, vector<16x32xf32> -> vector<16x32xf32>
    %10 = arith.addf %6, %9 : vector<16x32xf32>
    %c0_8 = arith.constant 0 : index
    %c0_9 = arith.constant 0 : index
    %11 = vector.load %arg6[%c0_8, %c0_9] : memref<16x32xf32, #tpu.memory_space<vmem>>, vector<16x32xf32>
    tpu.vector_store %arg6[%c0_8, %c0_9], %10 {strides = array<i32>} : memref<16x32xf32, #tpu.memory_space<vmem>>, vector<16x32xf32>,
    return
  }
  func.func @transform_0(%arg0: i32, %arg1: i32, %arg2: i32) -> (i32, i32, i32) {
    %c0_i32 = arith.constant 0 : i32
    %c0_i32_0 = arith.constant 0 : i32
    return %arg2, %arg0, %c0_i32 : i32, i32, i32
  }
  func.func @transform_1(%arg0: i32, %arg1: i32, %arg2: i32) -> (i32, i32, i32) {
    %c0_i32 = arith.constant 0 : i32
    %c0_i32_0 = arith.constant 0 : i32
    return %arg2, %c0_i32, %arg1 : i32, i32, i32
  }
  func.func @transform_2(%arg0: i32, %arg1: i32, %arg2: i32) -> (i32, i32) {
    %c0_i32 = arith.constant 0 : i32
    %c0_i32_0 = arith.constant 0 : i32
    return %c0_i32, %arg1 : i32, i32
  }
  func.func @transform_3(%arg0: i32, %arg1: i32, %arg2: i32) -> (i32, i32) {
    %c0_i32 = arith.constant 0 : i32
    return %arg0, %arg1 : i32, i32
  }
}

</mosaic_0001>

<llo_original>
// kernel: tpu_custom_call.1
$region0: #{tpu_custom_call.1}
  #allocation0 [shape = 'u32[]', space=smem, size = 0x4, offset = 0x4, fixed_abs, tag = 'smem constant byte address 0x4 - core index']
  #allocation1 [shape = 'u32[72,128]{1,0:T(1,128)}', space=vmem, size = 0x9000, scoped, tag = 'internal scratch']
  %s0 = inlined_call_operand.vmem [shape: f32[1,16,96], index: 0, kind: input, shape index: {}]
  %s1 = inlined_call_operand.vmem [shape: bf16[1,96,32], index: 1, kind: input, shape index: {}]
  %s2 = inlined_call_operand.vmem [shape: f32[1,32], index: 2, kind: input, shape index: {}]
  %s3 = inlined_call_operand.hbm [shape: f32[16,32], index: 3, kind: output, shape index: {}]
  %s4 = sld [smem:[#allocation0]]
  $region26: #{tpu_custom_call.1} parent=0
    _
  %s6 = ssub.s32 1, %s4
  %s7 = scalar_select 0, %s6, %s4
  $region1: #{tpu_custom_call.1} parent=0
    #allocation2 [shape = 'u8[8192]{0}', space=vmem, size = 0x2000, scoped, tag = 'output window, operand 0, single buffered']
    #allocation3 [shape = 's32[1]{0}', space=sflag, size = 0x4, scoped, tag = 'scoped memory for tpu_custom_call.1']
    %8 = vsyncpa [#allocation3], 0
    // Predicated region
    $region2: #{tpu_custom_call.1} parent=1 // pred_check
      _
    $region3: #{tpu_custom_call.1} parent=1 // pred_check_branch
      %10 = sbr.rel (0) target = $region5
    $region4: #{tpu_custom_call.1} parent=1 // pred_region
      _
    $region5: #{tpu_custom_call.1} parent=1 // pred_fallthru
      _
    // Predicated region
    $region6: #{tpu_custom_call.1} parent=1 // pred_check
      _
    $region7: #{tpu_custom_call.1} parent=1 // pred_check_branch
      %12 = sbr.rel (0) target = $region9
    $region8: #{tpu_custom_call.1} parent=1 // pred_region
      _
    $region9: #{tpu_custom_call.1} parent=1 // pred_fallthru
      _
    // Predicated region
    $region10: #{tpu_custom_call.1} parent=1 // pred_check
      _
    $region11: #{tpu_custom_call.1} parent=1 // pred_check_branch
      %14 = sbr.rel (0) target = $region13
    $region12: #{tpu_custom_call.1} parent=1 // pred_region
      _
    $region13: #{tpu_custom_call.1} parent=1 // pred_fallthru
      _
    %p16 = scmp.eq.s32.totalorder 0, 0
    // Predicated region
    $region14: #{tpu_custom_call.1} parent=1 // pred_check
      %p17 = pneg %p16
    $region15: #{tpu_custom_call.1} parent=1 // pred_check_branch
      %19 = sbr.rel (%p17) target = $region17
    $region16: #{tpu_custom_call.1} parent=1 // pred_region
      %v20 = vld [vmem:[%s2] sm:$0x1]
      %v22 = vperm.slane %v20, 0
      %vm24 = vcmask 261120
      %25 = vst.msk [vmem:[#allocation2] sm:$0xff] %vm24, %v22
      %26 = vst.msk [vmem:[#allocation2 + $0x8] sm:$0xff] %vm24, %v22
    $region17: #{tpu_custom_call.1} parent=1 // pred_fallthru
      _
    %v27 = vld [vmem:[%s0] sm:$0xff]
    %v28 = vld [vmem:[%s0 + $0x8] sm:$0xff]
    %v29 = vpack.c.bf16 %v28, %v27
    %v30 = vld [vmem:[#allocation2] sm:$0xff]
    %v31 = vld [vmem:[#allocation2 + $0x8] sm:$0xff]
    %v32 = vld [vmem:[%s1] sm:$0xf]
    %v33 = vld [vmem:[%s1 + $0x4] sm:$0xf]
    %v34 = vld [vmem:[%s1 + $0x8] sm:$0xf]
    %v35 = vld [vmem:[%s1 + $0xc] sm:$0xf]
    %v36 = vld [vmem:[%s1 + $0x10] sm:$0xf]
    %v37 = vld [vmem:[%s1 + $0x14] sm:$0xf]
    %v38 = vld [vmem:[%s1 + $0x18] sm:$0xf]
    %v39 = vld [vmem:[%s1 + $0x1c] sm:$0xf]
    %v40 = vld [vmem:[%s1 + $0x20] sm:$0xf]
    %v41 = vld [vmem:[%s1 + $0x24] sm:$0xf]
    %v42 = vld [vmem:[%s1 + $0x28] sm:$0xf]
    %v43 = vld [vmem:[%s1 + $0x2c] sm:$0xf]
    %v56 = vunpack.c.l.b16 %v32
    %v57 = vunpack.c.l.b16 %v33
    %v58 = vunpack.c.l.b16 %v34
    %v59 = vunpack.c.l.b16 %v35
    %v60 = vunpack.c.l.b16 %v36
    %v61 = vunpack.c.l.b16 %v37
    %v62 = vunpack.c.l.b16 %v38
    %v63 = vunpack.c.l.b16 %v39
    %v64 = vunpack.c.l.b16 %v40
    %v65 = vunpack.c.l.b16 %v41
    %v66 = vunpack.c.l.b16 %v42
    %v67 = vunpack.c.l.b16 %v43
    %v68 = vpack.c.b16 %v57, %v56
    %v69 = vpack.c.b16 %v59, %v58
    %v70 = vpack.c.b16 %v61, %v60
    %v71 = vpack.c.b16 %v63, %v62
    %v72 = vpack.c.b16 %v65, %v64
    %v73 = vpack.c.b16 %v67, %v66
    %vm80 = vcmask 785408
    %v82 = vsel %vm80, %v29, 0
    %84 = vmatpush.bf16.msra.mxu0 0
    %85 = vmatpush.bf16.msra.mxu0 0
    %86 = vmatpush.bf16.msra.mxu0 %v73
    %87 = vmatpush.bf16.msra.mxu0 %v72
    %88 = vmatpush.bf16.msra.mxu0 %v71
    %89 = vmatpush.bf16.msra.mxu0 %v70
    %90 = vmatpush.bf16.msra.mxu0 %v69
    %91 = vmatpush.bf16.msra.mxu0 %v68
    %92 = vmatmul.bf16.gmra.mxu0 %v82
    %v93 = vpop.f32.mrf.mxu0
    %v94 = vadd.f32 0.0, %v93
    %v95 = vpop.f32.mrf.mxu0
    %v96 = vadd.f32 0.0, %v95
    %97 = vdwg.mxu0
    %v98 = vadd.f32 %v30, %v94
    %v99 = vadd.f32 %v31, %v96
    %vm100 = vcmask 261120
    %101 = vst.msk [vmem:[#allocation2] sm:$0xff] %vm100, %v98
    %102 = vst.msk [vmem:[#allocation2 + $0x8] sm:$0xff] %vm100, %v99
    // Predicated region
    $region18: #{tpu_custom_call.1} parent=1 // pred_check
      _
    $region19: #{tpu_custom_call.1} parent=1 // pred_check_branch
      %104 = sbr.rel (0) target = $region21
    $region20: #{tpu_custom_call.1} parent=1 // pred_region
      %106 = vsyncadd [#allocation3], 0
      %s107 = sshll.u32 [#allocation2], 4
      %s108 = int_to_ptr.vmem [resolvable:$true] %s107
      %s109 = sshll.u32 %s3, 4
      %s110 = int_to_ptr.hbm [resolvable:$true] %s109
      %115 = dma.vmem_to_hbm [thread:$0]  %s108, 256, %s110, [#allocation3], 128, 128, 8
    $region21: #{tpu_custom_call.1} parent=1 // pred_fallthru
      _
    // Predicated region
    $region22: #{tpu_custom_call.1} parent=1 // pred_check
      _
    $region23: #{tpu_custom_call.1} parent=1 // pred_check_branch
      %117 = sbr.rel (0) target = $region25
    $region24: #{tpu_custom_call.1} parent=1 // pred_region
      %119 = dma.done [#allocation3], 256
    $region25: #{tpu_custom_call.1} parent=1 // pred_fallthru
      _
    %120 = vsyncpa [#allocation3], 1

</llo_original>
